<compile_context>
chip_gen: v7x
topology: tpu7x:2x2x1
jax: 0.10.0
libtpu: 0.0.40
codegen_flags: <defaults>
</compile_context>

<pallas_src>
import jax
import jax.numpy as jnp
from jax.experimental import pallas as pl
from jax.experimental.pallas import tpu as pltpu


def _round_up(n, m):
    return ((n + m - 1) // m) * m


def mlp_kernel(xT_ref, w1_ref, b1_ref, w2_ref, b2_ref, w3_ref, b3_ref, o_ref):
    # xT_ref: (in_size, TB) -- batch on the lane axis.
    xT = xT_ref[...]

    # fc1 + ReLU: (h1, in) @ (in, TB) -> (h1, TB), f32 MXU accumulation.
    h1 = jnp.dot(w1_ref[...], xT, preferred_element_type=jnp.float32) + b1_ref[...]
    h1 = jnp.maximum(h1, 0.0)

    # fc2 + ReLU: (h2, h1) @ (h1, TB) -> (h2, TB).
    h2 = jnp.dot(w2_ref[...], h1, preferred_element_type=jnp.float32) + b2_ref[...]
    h2 = jnp.maximum(h2, 0.0)

    # fc3: (1, h2) @ (h2, TB) -> (1, TB).  N = TB is large and lane-dense, so
    # this is a well-shaped MXU op (and the store below is an unmasked,
    # lane-dense vst).
    y = jnp.dot(w3_ref[...], h2, preferred_element_type=jnp.float32) + b3_ref[...]
    o_ref[...] = y.astype(o_ref.dtype)


def neural_net_forward(x, params, *, block_batch=8192):
    """x: (B, input_size) float32.

    params: torch-layout weights/biases:
      w1 (h1, in), b1 (h1,), w2 (h2, h1), b2 (h2,), w3 (out, h2), b3 (out,).
    Returns (B, out) float32.
    """
    w1, b1 = params["w1"], params["b1"]
    w2, b2 = params["w2"], params["b2"]
    w3, b3 = params["w3"], params["b3"]

    B, in_size = x.shape
    h1_size = w1.shape[0]
    h2_size = w2.shape[0]
    out_size = w3.shape[0]

    # Batch-on-lanes: present x to the kernel as (in_size, B).  One cheap XLA
    # transpose outside the kernel; all in-kernel matmuls are standard layout.
    xT = x.T

    # Biases as (out_features, 1) columns so they broadcast along the lane axis.
    b1c = b1.reshape(h1_size, 1)
    b2c = b2.reshape(h2_size, 1)
    b3c = b3.reshape(out_size, 1)

    # Batch tile: multiple of 128 (lane axis), at most block_batch, no wrapper
    # padding (ragged last block handled by Pallas read-pad / write-clip).
    tb = _round_up(min(block_batch, max(B, 1)), 128)
    tb = min(tb, _round_up(B, 128))
    # Keep >= 2 grid steps when the batch allows it so both v7x TensorCores
    # get work (no effect on v5e/v6e, which have one TC).
    if B > 128 and pl.cdiv(B, tb) < 2:
        tb = max(128, _round_up(pl.cdiv(B, 2), 128))
    num_tiles = pl.cdiv(B, tb)

    # Weights/biases: full-array blocks with constant index maps -> DMA'd once,
    # VMEM-resident across all batch tiles.
    def const_spec(shape):
        return pl.BlockSpec(shape, lambda i: (0, 0))

    flops = 2 * B * (in_size * h1_size + h1_size * h2_size + h2_size * out_size)
    bytes_accessed = (
        xT.size * xT.dtype.itemsize
        + B * out_size * 4
        + sum(p.size * p.dtype.itemsize for p in (w1, b1c, w2, b2c, w3, b3c))
    )

    out_t = pl.pallas_call(
        mlp_kernel,
        out_shape=jax.ShapeDtypeStruct((out_size, B), jnp.float32),
        grid=(num_tiles,),
        in_specs=[
            pl.BlockSpec((in_size, tb), lambda i: (0, i)),  # x^T: tiled over batch
            const_spec(w1.shape), const_spec(b1c.shape),
            const_spec(w2.shape), const_spec(b2c.shape),
            const_spec(w3.shape), const_spec(b3c.shape),
        ],
        out_specs=pl.BlockSpec((out_size, tb), lambda i: (0, i)),  # lane-dense store
        compiler_params=pltpu.CompilerParams(
            dimension_semantics=("parallel",),
        ),
        cost_estimate=pl.CostEstimate(
            flops=flops, transcendentals=0, bytes_accessed=bytes_accessed
        ),
    )(xT, w1, b1c, w2, b2c, w3, b3c)

    return out_t.T  # (B, out_size)


def init_params(key, input_size, hidden_size1, hidden_size2, output_size):
    """torch-layout init mimicking nn.Linear's uniform(-1/sqrt(fan_in), +1/sqrt(fan_in))."""
    ks = jax.random.split(key, 6)

    def linear(kw, kb, fan_in, fan_out):
        bound = 1.0 / jnp.sqrt(jnp.float32(fan_in))
        w = jax.random.uniform(kw, (fan_out, fan_in), jnp.float32, -bound, bound)
        b = jax.random.uniform(kb, (fan_out,), jnp.float32, -bound, bound)
        return w, b

    w1, b1 = linear(ks[0], ks[1], input_size, hidden_size1)
    w2, b2 = linear(ks[2], ks[3], hidden_size1, hidden_size2)
    w3, b3 = linear(ks[4], ks[5], hidden_size2, output_size)
    return {"w1": w1, "b1": b1, "w2": w2, "b2": b2, "w3": w3, "b3": b3}


def reference_forward(x, p):
    h1 = jnp.maximum(x @ p["w1"].T + p["b1"], 0.0)
    h2 = jnp.maximum(h1 @ p["w2"].T + p["b2"], 0.0)
    return h2 @ p["w3"].T + p["b3"]


if __name__ == "__main__":
    # Small shapes consistent with the module: tabular features -> 64 -> 32 -> 1.
    # batch=300 with block_batch=128 exercises the multi-tile batch grid and the
    # ragged (write-clipped) last tile while staying tiny.
    batch = 300
    input_size = 16
    hidden_size1 = 64
    hidden_size2 = 32
    output_size = 1

    key = jax.random.PRNGKey(0)
    kx, kp = jax.random.split(key)

    x = jax.random.normal(kx, (batch, input_size), jnp.float32)
    # Standardize like the training script does ((X - mean) / std over all elems).
    x = (x - x.mean()) / x.std()

    params = init_params(kp, input_size, hidden_size1, hidden_size2, output_size)

    out = neural_net_forward(x, params, block_batch=128)
    out = jax.block_until_ready(out)

    ref = reference_forward(x, params)
    assert out.shape == (batch, output_size), out.shape
    assert jnp.allclose(out, ref, atol=1e-4, rtol=1e-4), "mismatch vs JAX reference"

    print("KERNEL_OK")
</pallas_src>

<mosaic_0001>
module attributes {stable_mosaic.version = 11 : i64} {
  func.func @mlp_kernel(%arg0: i32, %arg1: memref<16x128xf32, #tpu.memory_space<vmem>>, %arg2: memref<64x16xf32, #tpu.memory_space<vmem>>, %arg3: memref<64x1xf32, #tpu.memory_space<vmem>>, %arg4: memref<32x64xf32, #tpu.memory_space<vmem>>, %arg5: memref<32x1xf32, #tpu.memory_space<vmem>>, %arg6: memref<1x32xf32, #tpu.memory_space<vmem>>, %arg7: memref<1x1xf32, #tpu.memory_space<vmem>>, %arg8: memref<1x128xf32, #tpu.memory_space<vmem>>) attributes {dimension_semantics = [#tpu.dimension_semantics<parallel>], iteration_bounds = array<i64: 3>, scalar_prefetch = 0 : i64, scratch_operands = 0 : i64, tpu.core_type = #tpu.core_type<tc>, window_params = [{transform_indices = @transform_0, window_bounds = array<i64: 16, 128>}, {pipeline_mode = #tpu.pipeline_mode<synchronous>, transform_indices = @transform_1, window_bounds = array<i64: 64, 16>}, {pipeline_mode = #tpu.pipeline_mode<synchronous>, transform_indices = @transform_2, window_bounds = array<i64: 64, 1>}, {pipeline_mode = #tpu.pipeline_mode<synchronous>, transform_indices = @transform_3, window_bounds = array<i64: 32, 64>}, {pipeline_mode = #tpu.pipeline_mode<synchronous>, transform_indices = @transform_4, window_bounds = array<i64: 32, 1>}, {pipeline_mode = #tpu.pipeline_mode<synchronous>, transform_indices = @transform_5, window_bounds = array<i64: 1, 32>}, {pipeline_mode = #tpu.pipeline_mode<synchronous>, transform_indices = @transform_6, window_bounds = array<i64: 1, 1>}, {transform_indices = @transform_7, window_bounds = array<i64: 1, 128>}]} {
    %c0 = arith.constant 0 : index
    %c0_0 = arith.constant 0 : index
    %0 = vector.load %arg1[%c0, %c0_0] : memref<16x128xf32, #tpu.memory_space<vmem>>, vector<16x128xf32>
    %c0_1 = arith.constant 0 : index
    %c0_2 = arith.constant 0 : index
    %1 = vector.load %arg2[%c0_1, %c0_2] : memref<64x16xf32, #tpu.memory_space<vmem>>, vector<64x16xf32>
    %cst = arith.constant dense<0.000000e+00> : vector<64x128xf32>
    %2 = tpu.matmul %1, %0, %cst {dimension_numbers = #tpu.dot_dimension_numbers<[1], [0], [0], [1], [0, 0, 1, 1], [], []>} : vector<64x16xf32>, vector<16x128xf32>, vector<64x128xf32> -> vector<64x128xf32>
    %c0_3 = arith.constant 0 : index
    %c0_4 = arith.constant 0 : index
    %3 = vector.load %arg3[%c0_3, %c0_4] : memref<64x1xf32, #tpu.memory_space<vmem>>, vector<64x1xf32>
    %4 = vector.broadcast %3 : vector<64x1xf32> to vector<64x128xf32>
    %5 = arith.addf %2, %4 : vector<64x128xf32>
    %cst_5 = arith.constant 0.000000e+00 : f32
    %6 = vector.broadcast %cst_5 : f32 to vector<64x128xf32>
    %7 = arith.maximumf %5, %6 : vector<64x128xf32>
    %c0_6 = arith.constant 0 : index
    %c0_7 = arith.constant 0 : index
    %8 = vector.load %arg4[%c0_6, %c0_7] : memref<32x64xf32, #tpu.memory_space<vmem>>, vector<32x64xf32>
    %cst_8 = arith.constant dense<0.000000e+00> : vector<32x128xf32>
    %9 = tpu.matmul %8, %7, %cst_8 {dimension_numbers = #tpu.dot_dimension_numbers<[1], [0], [0], [1], [0, 0, 1, 1], [], []>} : vector<32x64xf32>, vector<64x128xf32>, vector<32x128xf32> -> vector<32x128xf32>
    %c0_9 = arith.constant 0 : index
    %c0_10 = arith.constant 0 : index
    %10 = vector.load %arg5[%c0_9, %c0_10] : memref<32x1xf32, #tpu.memory_space<vmem>>, vector<32x1xf32>
    %11 = vector.broadcast %10 : vector<32x1xf32> to vector<32x128xf32>
    %12 = arith.addf %9, %11 : vector<32x128xf32>
    %cst_11 = arith.constant 0.000000e+00 : f32
    %13 = vector.broadcast %cst_11 : f32 to vector<32x128xf32>
    %14 = arith.maximumf %12, %13 : vector<32x128xf32>
    %c0_12 = arith.constant 0 : index
    %c0_13 = arith.constant 0 : index
    %15 = vector.load %arg6[%c0_12, %c0_13] : memref<1x32xf32, #tpu.memory_space<vmem>>, vector<1x32xf32>
    %cst_14 = arith.constant dense<0.000000e+00> : vector<1x128xf32>
    %16 = tpu.matmul %15, %14, %cst_14 {dimension_numbers = #tpu.dot_dimension_numbers<[1], [0], [0], [1], [0, 0, 1, 1], [], []>} : vector<1x32xf32>, vector<32x128xf32>, vector<1x128xf32> -> vector<1x128xf32>
    %c0_15 = arith.constant 0 : index
    %c0_16 = arith.constant 0 : index
    %17 = vector.load %arg7[%c0_15, %c0_16] : memref<1x1xf32, #tpu.memory_space<vmem>>, vector<1x1xf32>
    %18 = vector.broadcast %17 : vector<1x1xf32> to vector<1x128xf32>
    %19 = arith.addf %16, %18 : vector<1x128xf32>
    %c0_17 = arith.constant 0 : index
    %c0_18 = arith.constant 0 : index
    %20 = vector.load %arg8[%c0_17, %c0_18] : memref<1x128xf32, #tpu.memory_space<vmem>>, vector<1x128xf32>
    tpu.vector_store %arg8[%c0_17, %c0_18], %19 {strides = array<i32>} : memref<1x128xf32, #tpu.memory_space<vmem>>, vector<1x128xf32>,
    return
  }
  func.func @transform_0(%arg0: i32) -> (i32, i32) {
    %c0_i32 = arith.constant 0 : i32
    %c0_i32_0 = arith.constant 0 : i32
    return %c0_i32, %arg0 : i32, i32
  }
  func.func @transform_1(%arg0: i32) -> (i32, i32) {
    %c0_i32 = arith.constant 0 : i32
    %c0_i32_0 = arith.constant 0 : i32
    %c0_i32_1 = arith.constant 0 : i32
    return %c0_i32, %c0_i32_0 : i32, i32
  }
  func.func @transform_2(%arg0: i32) -> (i32, i32) {
    %c0_i32 = arith.constant 0 : i32
    %c0_i32_0 = arith.constant 0 : i32
    %c0_i32_1 = arith.constant 0 : i32
    return %c0_i32, %c0_i32_0 : i32, i32
  }
  func.func @transform_3(%arg0: i32) -> (i32, i32) {
    %c0_i32 = arith.constant 0 : i32
    %c0_i32_0 = arith.constant 0 : i32
    %c0_i32_1 = arith.constant 0 : i32
    return %c0_i32, %c0_i32_0 : i32, i32
  }
  func.func @transform_4(%arg0: i32) -> (i32, i32) {
    %c0_i32 = arith.constant 0 : i32
    %c0_i32_0 = arith.constant 0 : i32
    %c0_i32_1 = arith.constant 0 : i32
    return %c0_i32, %c0_i32_0 : i32, i32
  }
  func.func @transform_5(%arg0: i32) -> (i32, i32) {
    %c0_i32 = arith.constant 0 : i32
    %c0_i32_0 = arith.constant 0 : i32
    %c0_i32_1 = arith.constant 0 : i32
    return %c0_i32, %c0_i32_0 : i32, i32
  }
  func.func @transform_6(%arg0: i32) -> (i32, i32) {
    %c0_i32 = arith.constant 0 : i32
    %c0_i32_0 = arith.constant 0 : i32
    %c0_i32_1 = arith.constant 0 : i32
    return %c0_i32, %c0_i32_0 : i32, i32
  }
  func.func @transform_7(%arg0: i32) -> (i32, i32) {
    %c0_i32 = arith.constant 0 : i32
    %c0_i32_0 = arith.constant 0 : i32
    return %c0_i32, %arg0 : i32, i32
  }
}

</mosaic_0001>

<llo_original>
// kernel: tpu_custom_call.1
$region0: #{tpu_custom_call.1}
  #allocation0 [shape = 'u32[]', space=smem, size = 0x4, offset = 0x4, fixed_abs, tag = 'smem constant byte address 0x4 - core index']
  #allocation1 [shape = 'u32[144,128]{1,0:T(1,128)}', space=vmem, size = 0x12000, scoped, tag = 'internal scratch']
  #allocation2 [shape = 'f32[1,1]{1,0:T(1,128)S(1)}', space=vmem, size = 0x200, scoped, tag = 'scoped memory for tpu_custom_call.1']
  %s0 = inlined_call_operand.vmem [shape: f32[16,300], index: 0, kind: input, shape index: {}]
  %s1 = inlined_call_operand.vmem [shape: f32[64,16], index: 1, kind: input, shape index: {}]
  %s2 = inlined_call_operand.vmem [shape: f32[64,1], index: 2, kind: input, shape index: {}]
  %s3 = inlined_call_operand.vmem [shape: f32[32,64], index: 3, kind: input, shape index: {}]
  %s4 = inlined_call_operand.vmem [shape: f32[32,1], index: 4, kind: input, shape index: {}]
  %s5 = inlined_call_operand.vmem [shape: f32[1,32], index: 5, kind: input, shape index: {}]
  %s6 = inlined_call_operand.<no memory space> [shape: f32[1,1], index: 6, kind: input, shape index: {}]
  %s7 = inlined_call_operand.hbm [shape: f32[1,300], index: 7, kind: output, shape index: {}]
  %s8 = sld [smem:[#allocation0]]
  $region99: #{tpu_custom_call.1} parent=0
    _
  %s10 = ssub.s32 1, %s8
  %s11 = scalar_select 0, %s10, %s8
  %v12 = vstv %s6
  %13 = vst [vmem:[#allocation2] sm:$0x1] %v12
  $region1: #{tpu_custom_call.1} parent=0
    #allocation3 [shape = 'u8[16384]{0}', space=vmem, size = 0x4000, scoped, tag = 'input window, operand 0']
    #allocation4 [shape = 'u8[1024]{0}', space=vmem, size = 0x400, scoped, tag = 'output window, operand 0']
    #allocation5 [shape = 's32[2]{0}', space=sflag, size = 0x8, scoped, tag = 'scoped memory for tpu_custom_call.1']
    %14 = vsyncpa [#allocation5], 0
    %s15 = scalar_lea.sflag [#allocation5], 1
    %16 = vsyncpa %s15, 0
    loop: start=0, step=1, limit=5
    $region2: #{tpu_custom_call.1} parent=1 // loop_pre_header
      _
    $region3: #{tpu_custom_call.1} parent=1 // loop_header
      %s18 = sphi 0, %s22
      %p19 = scmp.ge.s32.totalorder %s18, 5
      %s28 = sphi 0, %s30
      %s31 = sphi 0, %s28
      %s32 = sphi 0, %s31
      %s48 = sphi 0, %s32
      %s52 = sphi 0, %s52
      %s54 = sphi 0, %s52
      %s55 = sphi 0, %s54
      %s69 = sphi 0, %s55
      %s73 = sphi 0, %s73
      %s75 = sphi 0, %s73
      %s76 = sphi 0, %s75
      %s90 = sphi 0, %s76
      %s94 = sphi 0, %s94
      %s96 = sphi 0, %s94
      %s97 = sphi 0, %s96
      %s111 = sphi 0, %s97
      %s115 = sphi 0, %s115
      %s117 = sphi 0, %s115
      %s118 = sphi 0, %s117
      %s132 = sphi 0, %s118
      %s136 = sphi 0, %s136
      %s138 = sphi 0, %s136
      %s139 = sphi 0, %s138
      %s153 = sphi 0, %s139
      %s157 = sphi 0, %s157
      %s159 = sphi 0, %s157
      %s160 = sphi 0, %s159
      %s174 = sphi 0, %s160
      %s180 = sphi 0, %s182
      %s183 = sphi 0, %s180
      %s184 = sphi 0, %s183
      %s200 = sphi 0, %s184
    $region4: #{tpu_custom_call.1} parent=1 // loop_header_branch
      %21 = sbr.rel (%p19) target = $region8
    $region5: #{tpu_custom_call.1} parent=1 // loop_body
      %s23 = ssub.s32 %s18, 1
      %s24 = ssub.s32 %s18, 2
      %s25 = sadd.s32 %s18, 1
      %s26 = ssub.s32 %s18, %s25
      %p27 = scmp.eq.s32.totalorder %s26, 0
      %s29 = sadd.s32 %s28, 1
      %s30 = scalar_select %p27, %s28, %s29
      %p33 = pneg %p27
      %p34 = scmp.eq.s32.totalorder %s18, 2
      %p35 = por %p33, %p34
      %p36 = scmp.ne.s32.totalorder %s28, %s31
      %p37 = scmp.eq.s32.totalorder %s18, 0
      %p38 = por %p36, %p37
      %p39 = scmp.ne.s32.totalorder %s28, %s31
      %p40 = scmp.eq.s32.totalorder %s23, 2
      %p41 = por %p39, %p40
      %p42 = scmp.ne.s32.totalorder %s31, %s32
      %p43 = scmp.eq.s32.totalorder %s23, 0
      %p44 = por %p42, %p43
      %p45 = scmp.ne.s32.totalorder %s31, %s32
      %p46 = scmp.eq.s32.totalorder %s24, 2
      %p47 = por %p45, %p46
      %p49 = scmp.ne.s32.totalorder %s32, %s48
      %p50 = scmp.eq.s32.totalorder %s24, 0
      %p51 = por %p49, %p50
      %s53 = sadd.s32 %s52, 1
      %p56 = scmp.eq.s32.totalorder %s18, 2
      %p57 = scmp.ne.s32.totalorder %s52, %s54
      %p58 = scmp.eq.s32.totalorder %s18, 0
      %p59 = por %p57, %p58
      %p60 = scmp.ne.s32.totalorder %s52, %s54
      %p61 = scmp.eq.s32.totalorder %s23, 2
      %p62 = por %p60, %p61
      %p63 = scmp.ne.s32.totalorder %s54, %s55
      %p64 = scmp.eq.s32.totalorder %s23, 0
      %p65 = por %p63, %p64
      %p66 = scmp.ne.s32.totalorder %s54, %s55
      %p67 = scmp.eq.s32.totalorder %s24, 2
      %p68 = por %p66, %p67
      %p70 = scmp.ne.s32.totalorder %s55, %s69
      %p71 = scmp.eq.s32.totalorder %s24, 0
      %p72 = por %p70, %p71
      %s74 = sadd.s32 %s73, 1
      %p77 = scmp.eq.s32.totalorder %s18, 2
      %p78 = scmp.ne.s32.totalorder %s73, %s75
      %p79 = scmp.eq.s32.totalorder %s18, 0
      %p80 = por %p78, %p79
      %p81 = scmp.ne.s32.totalorder %s73, %s75
      %p82 = scmp.eq.s32.totalorder %s23, 2
      %p83 = por %p81, %p82
      %p84 = scmp.ne.s32.totalorder %s75, %s76
      %p85 = scmp.eq.s32.totalorder %s23, 0
      %p86 = por %p84, %p85
      %p87 = scmp.ne.s32.totalorder %s75, %s76
      %p88 = scmp.eq.s32.totalorder %s24, 2
      %p89 = por %p87, %p88
      %p91 = scmp.ne.s32.totalorder %s76, %s90
      %p92 = scmp.eq.s32.totalorder %s24, 0
      %p93 = por %p91, %p92
      %s95 = sadd.s32 %s94, 1
      %p98 = scmp.eq.s32.totalorder %s18, 2
      %p99 = scmp.ne.s32.totalorder %s94, %s96
      %p100 = scmp.eq.s32.totalorder %s18, 0
      %p101 = por %p99, %p100
      %p102 = scmp.ne.s32.totalorder %s94, %s96
      %p103 = scmp.eq.s32.totalorder %s23, 2
      %p104 = por %p102, %p103
      %p105 = scmp.ne.s32.totalorder %s96, %s97
      %p106 = scmp.eq.s32.totalorder %s23, 0
      %p107 = por %p105, %p106
      %p108 = scmp.ne.s32.totalorder %s96, %s97
      %p109 = scmp.eq.s32.totalorder %s24, 2
      %p110 = por %p108, %p109
      %p112 = scmp.ne.s32.totalorder %s97, %s111
      %p113 = scmp.eq.s32.totalorder %s24, 0
      %p114 = por %p112, %p113
      %s116 = sadd.s32 %s115, 1
      %p119 = scmp.eq.s32.totalorder %s18, 2
      %p120 = scmp.ne.s32.totalorder %s115, %s117
      %p121 = scmp.eq.s32.totalorder %s18, 0
      %p122 = por %p120, %p121
      %p123 = scmp.ne.s32.totalorder %s115, %s117
      %p124 = scmp.eq.s32.totalorder %s23, 2
      %p125 = por %p123, %p124
      %p126 = scmp.ne.s32.totalorder %s117, %s118
      %p127 = scmp.eq.s32.totalorder %s23, 0
      %p128 = por %p126, %p127
      %p129 = scmp.ne.s32.totalorder %s117, %s118
      %p130 = scmp.eq.s32.totalorder %s24, 2
      %p131 = por %p129, %p130
      %p133 = scmp.ne.s32.totalorder %s118, %s132
      %p134 = scmp.eq.s32.totalorder %s24, 0
      %p135 = por %p133, %p134
      %s137 = sadd.s32 %s136, 1
      %p140 = scmp.eq.s32.totalorder %s18, 2
      %p141 = scmp.ne.s32.totalorder %s136, %s138
      %p142 = scmp.eq.s32.totalorder %s18, 0
      %p143 = por %p141, %p142
      %p144 = scmp.ne.s32.totalorder %s136, %s138
      %p145 = scmp.eq.s32.totalorder %s23, 2
      %p146 = por %p144, %p145
      %p147 = scmp.ne.s32.totalorder %s138, %s139
      %p148 = scmp.eq.s32.totalorder %s23, 0
      %p149 = por %p147, %p148
      %p150 = scmp.ne.s32.totalorder %s138, %s139
      %p151 = scmp.eq.s32.totalorder %s24, 2
      %p152 = por %p150, %p151
      %p154 = scmp.ne.s32.totalorder %s139, %s153
      %p155 = scmp.eq.s32.totalorder %s24, 0
      %p156 = por %p154, %p155
      %s158 = sadd.s32 %s157, 1
      %p161 = scmp.eq.s32.totalorder %s18, 2
      %p162 = scmp.ne.s32.totalorder %s157, %s159
      %p163 = scmp.eq.s32.totalorder %s18, 0
      %p164 = por %p162, %p163
      %p165 = scmp.ne.s32.totalorder %s157, %s159
      %p166 = scmp.eq.s32.totalorder %s23, 2
      %p167 = por %p165, %p166
      %p168 = scmp.ne.s32.totalorder %s159, %s160
      %p169 = scmp.eq.s32.totalorder %s23, 0
      %p170 = por %p168, %p169
      %p171 = scmp.ne.s32.totalorder %s159, %s160
      %p172 = scmp.eq.s32.totalorder %s24, 2
      %p173 = por %p171, %p172
      %p175 = scmp.ne.s32.totalorder %s160, %s174
      %p176 = scmp.eq.s32.totalorder %s24, 0
      %p177 = por %p175, %p176
      %s178 = ssub.s32 %s18, %s25
      %p179 = scmp.eq.s32.totalorder %s178, 0
      %s181 = sadd.s32 %s180, 1
      %s182 = scalar_select %p179, %s180, %s181
      %p185 = pneg %p179
      %p186 = scmp.eq.s32.totalorder %s18, 2
      %p187 = por %p185, %p186
      %p188 = scmp.ne.s32.totalorder %s180, %s183
      %p189 = scmp.eq.s32.totalorder %s18, 0
      %p190 = por %p188, %p189
      %p191 = scmp.ne.s32.totalorder %s180, %s183
      %p192 = scmp.eq.s32.totalorder %s23, 2
      %p193 = por %p191, %p192
      %p194 = scmp.ne.s32.totalorder %s183, %s184
      %p195 = scmp.eq.s32.totalorder %s23, 0
      %p196 = por %p194, %p195
      %p197 = scmp.ne.s32.totalorder %s183, %s184
      %p198 = scmp.eq.s32.totalorder %s24, 2
      %p199 = por %p197, %p198
      %p201 = scmp.ne.s32.totalorder %s184, %s200
      %p202 = scmp.eq.s32.totalorder %s24, 0
      %p203 = por %p201, %p202
      %p204 = scmp.le.s32.totalorder 1, %s18
      %p205 = scmp.lt.s32.totalorder %s18, 4
      %p206 = pnand %p204, %p205
      %p207 = pneg %p206
      // Predicated region
      $region9: #{tpu_custom_call.1} parent=5 // pred_check
        _
      $region10: #{tpu_custom_call.1} parent=5 // pred_check_branch
        %209 = sbr.rel (%p206) target = $region12
      $region11: #{tpu_custom_call.1} parent=5 // pred_region
        %s210 = ssub.s32 %s18, 1
        // Predicated region
        $region13: #{tpu_custom_call.1} parent=11 // pred_check
          %p211 = pneg %p65
        $region14: #{tpu_custom_call.1} parent=11 // pred_check_branch
          %213 = sbr.rel (%p211) target = $region16
        $region15: #{tpu_custom_call.1} parent=11 // pred_region
          _
        $region16: #{tpu_custom_call.1} parent=11 // pred_fallthru
          _
        // Predicated region
        $region17: #{tpu_custom_call.1} parent=11 // pred_check
          %p214 = pneg %p86
        $region18: #{tpu_custom_call.1} parent=11 // pred_check_branch
          %216 = sbr.rel (%p214) target = $region20
        $region19: #{tpu_custom_call.1} parent=11 // pred_region
          _
        $region20: #{tpu_custom_call.1} parent=11 // pred_fallthru
          _
        // Predicated region
        $region21: #{tpu_custom_call.1} parent=11 // pred_check
          %p217 = pneg %p107
        $region22: #{tpu_custom_call.1} parent=11 // pred_check_branch
          %219 = sbr.rel (%p217) target = $region24
        $region23: #{tpu_custom_call.1} parent=11 // pred_region
          _
        $region24: #{tpu_custom_call.1} parent=11 // pred_fallthru
          _
        // Predicated region
        $region25: #{tpu_custom_call.1} parent=11 // pred_check
          %p220 = pneg %p128
        $region26: #{tpu_custom_call.1} parent=11 // pred_check_branch
          %222 = sbr.rel (%p220) target = $region28
        $region27: #{tpu_custom_call.1} parent=11 // pred_region
          _
        $region28: #{tpu_custom_call.1} parent=11 // pred_fallthru
          _
        // Predicated region
        $region29: #{tpu_custom_call.1} parent=11 // pred_check
          %p223 = pneg %p149
        $region30: #{tpu_custom_call.1} parent=11 // pred_check_branch
          %225 = sbr.rel (%p223) target = $region32
        $region31: #{tpu_custom_call.1} parent=11 // pred_region
          _
        $region32: #{tpu_custom_call.1} parent=11 // pred_fallthru
          _
        // Predicated region
        $region33: #{tpu_custom_call.1} parent=11 // pred_check
          %p226 = pneg %p170
        $region34: #{tpu_custom_call.1} parent=11 // pred_check_branch
          %228 = sbr.rel (%p226) target = $region36
        $region35: #{tpu_custom_call.1} parent=11 // pred_region
          _
        $region36: #{tpu_custom_call.1} parent=11 // pred_fallthru
          _
      $region12: #{tpu_custom_call.1} parent=5 // pred_fallthru
        _
      %p229 = scmp.lt.s32.totalorder %s18, 3
      // Predicated region
      $region37: #{tpu_custom_call.1} parent=5 // pred_check
        %p230 = pneg %p229
      $region38: #{tpu_custom_call.1} parent=5 // pred_check_branch
        %232 = sbr.rel (%p230) target = $region40
      $region39: #{tpu_custom_call.1} parent=5 // pred_region
        // Predicated region
        $region41: #{tpu_custom_call.1} parent=39 // pred_check
          %p233 = pneg %p38
        $region42: #{tpu_custom_call.1} parent=39 // pred_check_branch
          %235 = sbr.rel (%p233) target = $region44
        $region43: #{tpu_custom_call.1} parent=39 // pred_region
          %s236 = sand.u32 %s28, 1
          %s237 = sand.u32 %s28, 1
          %s238 = smul.addr %s237, 16
          %s239 = scalar_lea.vmem [#allocation3], %s238
          %s240 = smul.addr %s18, 8
          %s241 = scalar_lea.vmem %s0, %s240
          // Predicated region
          $region45: #{tpu_custom_call.1} parent=43 // pred_check
            _
          $region46: #{tpu_custom_call.1} parent=43 // pred_check_branch
            %243 = sbr.rel (0) target = $region48
          $region47: #{tpu_custom_call.1} parent=43 // pred_region
            // Predicated region
            $region49: #{tpu_custom_call.1} parent=47 // pred_check
              _
            $region50: #{tpu_custom_call.1} parent=47 // pred_check_branch
              %245 = sbr.rel (0) target = $region52
            $region51: #{tpu_custom_call.1} parent=47 // pred_region
              // Predicated region
              $region64: #{tpu_custom_call.1} parent=51 // pred_check
                _
              $region65: #{tpu_custom_call.1} parent=51 // pred_check_branch
                %262 = sbr.rel (0) target = $region67
              $region66: #{tpu_custom_call.1} parent=51 // pred_region
                loop: start=0, step=1, limit=1
                $region68: #{tpu_custom_call.1} parent=66 // loop_pre_header
                  _
                $region69: #{tpu_custom_call.1} parent=66 // loop_header
                  %s264 = sphi 0, %s268
                  %p265 = scmp.ge.s32.totalorder %s264, 1
                  %s269 = sphi %s241, %s241
                  %s270 = sphi %s239, %s239
                $region70: #{tpu_custom_call.1} parent=66 // loop_header_branch
                  %267 = sbr.rel (%p265) target = $region74
                $region71: #{tpu_custom_call.1} parent=66 // loop_body
                  %v271 = vld [vmem:[%s269] sm:$0xff]
                  %272 = vst [vmem:[%s270] sm:$0xff] %v271
                  %v273 = vld [vmem:[%s269 + $0x18] sm:$0xff]
                  %274 = vst [vmem:[%s270 + $0x8] sm:$0xff] %v273
                $region72: #{tpu_custom_call.1} parent=66 // loop_footer
                  %s268 = sadd.s32 1, %s264
                $region73: #{tpu_custom_call.1} parent=66 // loop_footer_branch
                  %263 = sbr.rel target = $region69
                $region74: #{tpu_custom_call.1} parent=66 // loop_exit
                  _
              $region67: #{tpu_custom_call.1} parent=51 // pred_fallthru
                _
              // Predicated region
              $region75: #{tpu_custom_call.1} parent=51 // pred_check
                _
              $region76: #{tpu_custom_call.1} parent=51 // pred_check_branch
                %276 = sbr.rel target = $region78
              $region77: #{tpu_custom_call.1} parent=51 // pred_region
                _
              $region78: #{tpu_custom_call.1} parent=51 // pred_fallthru
                _
            $region52: #{tpu_custom_call.1} parent=47 // pred_fallthru
              _
            // Predicated region
            $region53: #{tpu_custom_call.1} parent=47 // pred_check
              _
            $region54: #{tpu_custom_call.1} parent=47 // pred_check_branch
              %247 = sbr.rel target = $region56
            $region55: #{tpu_custom_call.1} parent=47 // pred_region
              loop: start=0, step=1, limit=1
              $region57: #{tpu_custom_call.1} parent=55 // loop_pre_header
                _
              $region58: #{tpu_custom_call.1} parent=55 // loop_header
                %s250 = sphi 0, %s254
                %p251 = scmp.ge.s32.totalorder %s250, 1
                %s255 = sphi %s241, %s241
                %s256 = sphi %s239, %s239
              $region59: #{tpu_custom_call.1} parent=55 // loop_header_branch
                %253 = sbr.rel (%p251) target = $region63
              $region60: #{tpu_custom_call.1} parent=55 // loop_body
                %v257 = vld [vmem:[%s255] sm:$0xff]
                %258 = vst [vmem:[%s256] sm:$0xff] %v257
                %v259 = vld [vmem:[%s255 + $0x18] sm:$0xff]
                %260 = vst [vmem:[%s256 + $0x8] sm:$0xff] %v259
              $region61: #{tpu_custom_call.1} parent=55 // loop_footer
                %s254 = sadd.s32 1, %s250
              $region62: #{tpu_custom_call.1} parent=55 // loop_footer_branch
                %249 = sbr.rel target = $region58
              $region63: #{tpu_custom_call.1} parent=55 // loop_exit
                _
            $region56: #{tpu_custom_call.1} parent=47 // pred_fallthru
              _
          $region48: #{tpu_custom_call.1} parent=43 // pred_fallthru
            _
          %277 = vnop
        $region44: #{tpu_custom_call.1} parent=39 // pred_fallthru
          _
      $region40: #{tpu_custom_call.1} parent=5 // pred_fallthru
        _
      %p278 = scmp.le.s32.totalorder 1, %s18
      %p279 = scmp.lt.s32.totalorder %s18, 4
      %p280 = pnand %p278, %p279
      %p281 = pneg %p280
      // Predicated region
      $region79: #{tpu_custom_call.1} parent=5 // pred_check
        _
      $region80: #{tpu_custom_call.1} parent=5 // pred_check_branch
        %283 = sbr.rel (%p280) target = $region82
      $region81: #{tpu_custom_call.1} parent=5 // pred_region
        %s284 = ssub.s32 %s18, 1
        %s285 = sand.u32 %s31, 1
        %s286 = sand.u32 %s31, 1
        %s287 = smul.addr %s286, 16
        %s288 = scalar_lea.vmem [#allocation3], %s287
        // Predicated region
        $region83: #{tpu_custom_call.1} parent=81 // pred_check
          %p289 = pneg %p44
        $region84: #{tpu_custom_call.1} parent=81 // pred_check_branch
          %291 = sbr.rel (%p289) target = $region86
        $region85: #{tpu_custom_call.1} parent=81 // pred_region
          _
        $region86: #{tpu_custom_call.1} parent=81 // pred_fallthru
          _
        %s292 = sand.u32 %s31, 1
        %s293 = sand.u32 %s31, 1
        %s294 = smul.addr %s293, 16
        %s295 = scalar_lea.vmem [#allocation3], %s294
        %p296 = pneg %p44
        %p297 = pneg %p41
        %p298 = pneg %p65
        %p299 = pneg %p62
        %p300 = pneg %p86
        %p301 = pneg %p83
        %p302 = pneg %p107
        %p303 = pneg %p104
        %p304 = pneg %p128
        %p305 = pneg %p125
        %p306 = pneg %p149
        %p307 = pneg %p146
        %p308 = pneg %p170
        %p309 = pneg %p167
        %p310 = pneg %p196
        %p311 = pneg %p193
        %s312 = sand.u32 %s183, 1
        %s313 = scalar_lea.sflag [#allocation5], %s312
        %s314 = sand.u32 %s183, 1
        %s315 = scalar_lea.vmem [#allocation4], %s314
        %v316 = vld [vmem:[%s288] sm:$0xff]
        %v317 = vld [vmem:[%s288 + $0x8] sm:$0xff]
        %v318 = vld [vmem:[%s1] sm:$0xff]
        %v319 = vld [vmem:[%s1 + $0x8] sm:$0xff]
        %v320 = vld [vmem:[%s1 + $0x10] sm:$0xff]
        %v321 = vld [vmem:[%s1 + $0x18] sm:$0xff]
        %v322 = vld [vmem:[%s1 + $0x20] sm:$0xff]
        %v323 = vld [vmem:[%s1 + $0x28] sm:$0xff]
        %v324 = vld [vmem:[%s1 + $0x30] sm:$0xff]
        %v325 = vld [vmem:[%s1 + $0x38] sm:$0xff]
        %v326 = vld [vmem:[%s2] sm:$0xff]
        %v327 = vld [vmem:[%s2 + $0x8] sm:$0xff]
        %v328 = vld [vmem:[%s2 + $0x10] sm:$0xff]
        %v329 = vld [vmem:[%s2 + $0x18] sm:$0xff]
        %v330 = vld [vmem:[%s2 + $0x20] sm:$0xff]
        %v331 = vld [vmem:[%s2 + $0x28] sm:$0xff]
        %v332 = vld [vmem:[%s2 + $0x30] sm:$0xff]
        %v333 = vld [vmem:[%s2 + $0x38] sm:$0xff]
        %335 = vset.pattern.permute.xlu0 0
        %336 = vperm.xlu0 %335, %v326
        %v337 = vpop.permute.xlu0 %336
        %340 = vset.pattern.permute.xlu0 0
        %341 = vperm.xlu0 %340, %v327
        %v342 = vpop.permute.xlu0 %341
        %345 = vset.pattern.permute.xlu0 0
        %346 = vperm.xlu0 %345, %v328
        %v347 = vpop.permute.xlu0 %346
        %350 = vset.pattern.permute.xlu0 0
        %351 = vperm.xlu0 %350, %v329
        %v352 = vpop.permute.xlu0 %351
        %355 = vset.pattern.permute.xlu0 0
        %356 = vperm.xlu0 %355, %v330
        %v357 = vpop.permute.xlu0 %356
        %360 = vset.pattern.permute.xlu0 0
        %361 = vperm.xlu0 %360, %v331
        %v362 = vpop.permute.xlu0 %361
        %365 = vset.pattern.permute.xlu0 0
        %366 = vperm.xlu0 %365, %v332
        %v367 = vpop.permute.xlu0 %366
        %370 = vset.pattern.permute.xlu0 0
        %371 = vperm.xlu0 %370, %v333
        %v372 = vpop.permute.xlu0 %371
        %vm374 = vcmask 130048
        %v376 = vsel %vm374, %v318, 0
        %v379 = vsel %vm374, %v319, 0
        %v382 = vsel %vm374, %v320, 0
        %v385 = vsel %vm374, %v321, 0
        %v388 = vsel %vm374, %v322, 0
        %v391 = vsel %vm374, %v323, 0
        %v394 = vsel %vm374, %v324, 0
        %v397 = vsel %vm374, %v325, 0
        %399 = vmatprep.subr.mxu0 0.0
        %400 = vmatpush1.msra.mxu0 %v316
        %401 = vmatprep.subr.mxu0 0.0
        %402 = vmatpush1.msra.mxu0 %v317
        %403 = vmatprep.subr.mxu0 0.0
        %404 = vmatpush1.msra.mxu0 0.0
        %405 = vmatprep.subr.mxu0 0.0
        %406 = vmatpush1.msra.mxu0 0.0
        %407 = vmatprep.subr.mxu0 0.0
        %408 = vmatpush1.msra.mxu0 0.0
        %409 = vmatprep.subr.mxu0 0.0
        %410 = vmatpush1.msra.mxu0 0.0
        %411 = vmatprep.subr.mxu0 0.0
        %412 = vmatpush1.msra.mxu0 0.0
        %413 = vmatprep.subr.mxu0 0.0
        %414 = vmatpush1.msra.mxu0 0.0
        %415 = vmatprep.subr.mxu0 0.0
        %416 = vmatpush1.msra.mxu0 0.0
        %417 = vmatprep.subr.mxu0 0.0
        %418 = vmatpush1.msra.mxu0 0.0
        %419 = vmatprep.subr.mxu0 0.0
        %420 = vmatpush1.msra.mxu0 0.0
        %421 = vmatprep.subr.mxu0 0.0
        %422 = vmatpush1.msra.mxu0 0.0
        %423 = vmatprep.subr.mxu0 0.0
        %424 = vmatpush1.msra.mxu0 0.0
        %425 = vmatprep.subr.mxu0 0.0
        %426 = vmatpush1.msra.mxu0 0.0
        %427 = vmatprep.subr.mxu0 0.0
        %428 = vmatpush1.msra.mxu0 0.0
        %429 = vmatprep.subr.mxu0 0.0
        %430 = vmatpush1.msra.mxu0 0.0
        %431 = vmatprep.subr.mxu0 0.0
        %432 = vmatpush1.msra.mxu0 0.0
        %433 = vmatprep.subr.mxu0 0.0
        %434 = vmatpush1.msra.mxu0 0.0
        %435 = vmatprep.subr.mxu0 0.0
        %436 = vmatpush1.msra.mxu0 0.0
        %437 = vmatprep.subr.mxu0 0.0
        %438 = vmatpush1.msra.mxu0 0.0
        %439 = vmatprep.subr.mxu0 0.0
        %440 = vmatpush1.msra.mxu0 0.0
        %441 = vmatprep.subr.mxu0 0.0
        %442 = vmatpush1.msra.mxu0 0.0
        %443 = vmatprep.subr.mxu0 0.0
        %444 = vmatpush1.msra.mxu0 0.0
        %445 = vmatprep.subr.mxu0 0.0
        %446 = vmatpush1.msra.mxu0 0.0
        %447 = vmatprep.subr.mxu0 0.0
        %448 = vmatpush1.msra.mxu0 0.0
        %449 = vmatprep.subr.mxu0 0.0
        %450 = vmatpush1.msra.mxu0 0.0
        %451 = vmatprep.subr.mxu0 0.0
        %452 = vmatpush1.msra.mxu0 0.0
        %453 = vmatprep.subr.mxu0 0.0
        %454 = vmatpush1.msra.mxu0 0.0
        %455 = vmatprep.subr.mxu0 0.0
        %456 = vmatpush1.msra.mxu0 0.0
        %457 = vmatprep.subr.mxu0 0.0
        %458 = vmatpush1.msra.mxu0 0.0
        %459 = vmatprep.subr.mxu0 0.0
        %460 = vmatpush1.msra.mxu0 0.0
        %461 = vmatprep.subr.mxu0 0.0
        %462 = vmatpush1.msra.mxu0 0.0
        %463 = vmatprep.mubr.f32.mxu0 0.0
        %464 = vmatmul.mubr.f32.gmra.mrb[0].mxu0 %v376
        %v465 = vpop.f32.mrb[0].mxu0
        %v466 = vadd.f32 %v337, %v465
        %v467 = vpop.f32.mrb[0].mxu0
        %468 = vmatprep.mubr.f32.mxu0 0.0
        %469 = vmatmul.mubr.f32.gmra.mrb[0].mxu0 %v379
        %v470 = vpop.f32.mrb[0].mxu0
        %v471 = vadd.f32 %v342, %v470
        %v472 = vpop.f32.mrb[0].mxu0
        %473 = vmatprep.mubr.f32.mxu0 0.0
        %474 = vmatmul.mubr.f32.gmra.mrb[0].mxu0 %v382
        %v475 = vpop.f32.mrb[0].mxu0
        %v476 = vadd.f32 %v347, %v475
        %v477 = vpop.f32.mrb[0].mxu0
        %478 = vmatprep.mubr.f32.mxu0 0.0
        %479 = vmatmul.mubr.f32.gmra.mrb[0].mxu0 %v385
        %v480 = vpop.f32.mrb[0].mxu0
        %v481 = vadd.f32 %v352, %v480
        %v482 = vpop.f32.mrb[0].mxu0
        %483 = vmatprep.mubr.f32.mxu0 0.0
        %484 = vmatmul.mubr.f32.gmra.mrb[0].mxu0 %v388
        %v485 = vpop.f32.mrb[0].mxu0
        %v486 = vadd.f32 %v357, %v485
        %v487 = vpop.f32.mrb[0].mxu0
        %488 = vmatprep.mubr.f32.mxu0 0.0
        %489 = vmatmul.mubr.f32.gmra.mrb[0].mxu0 %v391
        %v490 = vpop.f32.mrb[0].mxu0
        %v491 = vadd.f32 %v362, %v490
        %v492 = vpop.f32.mrb[0].mxu0
        %493 = vmatprep.mubr.f32.mxu0 0.0
        %494 = vmatmul.mubr.f32.gmra.mrb[0].mxu0 %v394
        %v495 = vpop.f32.mrb[0].mxu0
        %v496 = vadd.f32 %v367, %v495
        %v497 = vpop.f32.mrb[0].mxu0
        %498 = vmatprep.mubr.f32.mxu0 0.0
        %499 = vmatmul.mubr.f32.gmra.mrb[0].mxu0 %v397
        %v500 = vpop.f32.mrb[0].mxu0
        %v501 = vadd.f32 %v372, %v500
        %v502 = vpop.f32.mrb[0].mxu0
        %503 = vdwg.mxu0
        %v504 = vmax.f32 %v466, 0.0
        %v505 = vmax.f32 %v471, 0.0
        %v506 = vmax.f32 %v476, 0.0
        %v507 = vmax.f32 %v481, 0.0
        %v508 = vmax.f32 %v486, 0.0
        %v509 = vmax.f32 %v491, 0.0
        %v510 = vmax.f32 %v496, 0.0
        %v511 = vmax.f32 %v501, 0.0
        %v512 = vld [vmem:[%s3] sm:$0xff]
        %v513 = vld [vmem:[%s3 + $0x8] sm:$0xff]
        %v514 = vld [vmem:[%s3 + $0x10] sm:$0xff]
        %v515 = vld [vmem:[%s3 + $0x18] sm:$0xff]
        %v516 = vld [vmem:[%s4] sm:$0xff]
        %v517 = vld [vmem:[%s4 + $0x8] sm:$0xff]
        %v518 = vld [vmem:[%s4 + $0x10] sm:$0xff]
        %v519 = vld [vmem:[%s4 + $0x18] sm:$0xff]
        %521 = vset.pattern.permute.xlu0 0
        %522 = vperm.xlu0 %521, %v516
        %v523 = vpop.permute.xlu0 %522
        %526 = vset.pattern.permute.xlu0 0
        %527 = vperm.xlu0 %526, %v517
        %v528 = vpop.permute.xlu0 %527
        %531 = vset.pattern.permute.xlu0 0
        %532 = vperm.xlu0 %531, %v518
        %v533 = vpop.permute.xlu0 %532
        %536 = vset.pattern.permute.xlu0 0
        %537 = vperm.xlu0 %536, %v519
        %v538 = vpop.permute.xlu0 %537
        %vm540 = vcmask 523264
        %v542 = vsel %vm540, %v512, 0
        %v545 = vsel %vm540, %v513, 0
        %v548 = vsel %vm540, %v514, 0
        %v551 = vsel %vm540, %v515, 0
        %553 = vmatprep.subr.mxu0 0.0
        %554 = vmatpush1.msra.mxu0 %v504
        %555 = vmatprep.subr.mxu0 0.0
        %556 = vmatpush1.msra.mxu0 %v505
        %557 = vmatprep.subr.mxu0 0.0
        %558 = vmatpush1.msra.mxu0 %v506
        %559 = vmatprep.subr.mxu0 0.0
        %560 = vmatpush1.msra.mxu0 %v507
        %561 = vmatprep.subr.mxu0 0.0
        %562 = vmatpush1.msra.mxu0 %v508
        %563 = vmatprep.subr.mxu0 0.0
        %564 = vmatpush1.msra.mxu0 %v509
        %565 = vmatprep.subr.mxu0 0.0
        %566 = vmatpush1.msra.mxu0 %v510
        %567 = vmatprep.subr.mxu0 0.0
        %568 = vmatpush1.msra.mxu0 %v511
        %569 = vmatprep.subr.mxu0 0.0
        %570 = vmatpush1.msra.mxu0 0.0
        %571 = vmatprep.subr.mxu0 0.0
        %572 = vmatpush1.msra.mxu0 0.0
        %573 = vmatprep.subr.mxu0 0.0
        %574 = vmatpush1.msra.mxu0 0.0
        %575 = vmatprep.subr.mxu0 0.0
        %576 = vmatpush1.msra.mxu0 0.0
        %577 = vmatprep.subr.mxu0 0.0
        %578 = vmatpush1.msra.mxu0 0.0
        %579 = vmatprep.subr.mxu0 0.0
        %580 = vmatpush1.msra.mxu0 0.0
        %581 = vmatprep.subr.mxu0 0.0
        %582 = vmatpush1.msra.mxu0 0.0
        %583 = vmatprep.subr.mxu0 0.0
        %584 = vmatpush1.msra.mxu0 0.0
        %585 = vmatprep.subr.mxu0 0.0
        %586 = vmatpush1.msra.mxu0 0.0
        %587 = vmatprep.subr.mxu0 0.0
        %588 = vmatpush1.msra.mxu0 0.0
        %589 = vmatprep.subr.mxu0 0.0
        %590 = vmatpush1.msra.mxu0 0.0
        %591 = vmatprep.subr.mxu0 0.0
        %592 = vmatpush1.msra.mxu0 0.0
        %593 = vmatprep.subr.mxu0 0.0
        %594 = vmatpush1.msra.mxu0 0.0
        %595 = vmatprep.subr.mxu0 0.0
        %596 = vmatpush1.msra.mxu0 0.0
        %597 = vmatprep.subr.mxu0 0.0
        %598 = vmatpush1.msra.mxu0 0.0
        %599 = vmatprep.subr.mxu0 0.0
        %600 = vmatpush1.msra.mxu0 0.0
        %601 = vmatprep.subr.mxu0 0.0
        %602 = vmatpush1.msra.mxu0 0.0
        %603 = vmatprep.subr.mxu0 0.0
        %604 = vmatpush1.msra.mxu0 0.0
        %605 = vmatprep.subr.mxu0 0.0
        %606 = vmatpush1.msra.mxu0 0.0
        %607 = vmatprep.subr.mxu0 0.0
        %608 = vmatpush1.msra.mxu0 0.0
        %609 = vmatprep.subr.mxu0 0.0
        %610 = vmatpush1.msra.mxu0 0.0
        %611 = vmatprep.subr.mxu0 0.0
        %612 = vmatpush1.msra.mxu0 0.0
        %613 = vmatprep.subr.mxu0 0.0
        %614 = vmatpush1.msra.mxu0 0.0
        %615 = vmatprep.subr.mxu0 0.0
        %616 = vmatpush1.msra.mxu0 0.0
        %617 = vmatprep.mubr.f32.mxu0 0.0
        %618 = vmatmul.mubr.f32.gmra.mrb[0].mxu0 %v542
        %v619 = vpop.f32.mrb[0].mxu0
        %v620 = vadd.f32 %v523, %v619
        %v621 = vpop.f32.mrb[0].mxu0
        %622 = vmatprep.mubr.f32.mxu0 0.0
        %623 = vmatmul.mubr.f32.gmra.mrb[0].mxu0 %v545
        %v624 = vpop.f32.mrb[0].mxu0
        %v625 = vadd.f32 %v528, %v624
        %v626 = vpop.f32.mrb[0].mxu0
        %627 = vmatprep.mubr.f32.mxu0 0.0
        %628 = vmatmul.mubr.f32.gmra.mrb[0].mxu0 %v548
        %v629 = vpop.f32.mrb[0].mxu0
        %v630 = vadd.f32 %v533, %v629
        %v631 = vpop.f32.mrb[0].mxu0
        %632 = vmatprep.mubr.f32.mxu0 0.0
        %633 = vmatmul.mubr.f32.gmra.mrb[0].mxu0 %v551
        %v634 = vpop.f32.mrb[0].mxu0
        %v635 = vadd.f32 %v538, %v634
        %v636 = vpop.f32.mrb[0].mxu0
        %637 = vdwg.mxu0
        %v638 = vmax.f32 %v620, 0.0
        %v639 = vmax.f32 %v625, 0.0
        %v640 = vmax.f32 %v630, 0.0
        %v641 = vmax.f32 %v635, 0.0
        %v642 = vld [vmem:[%s5] sm:$0x1]
        %v643 = vld [vmem:[#allocation2] sm:$0x1]
        %645 = vset.pattern.permute.xlu0 0
        %646 = vperm.xlu0 %645, %v643
        %v647 = vpop.permute.xlu0 %646
        %v649 = vlaneseq
        %v650 = vshrl.u32 %v649, 7
        %v651 = vsub.s32 0, %v650
        %v652 = vrot.slane %v647, %v651
        %vm653 = vcmask 261120
        %v655 = vsel %vm653, %v642, 0
        %657 = vmatprep.subr.mxu0 0.0
        %658 = vmatpush1.msra.mxu0 %v638
        %659 = vmatprep.subr.mxu0 0.0
        %660 = vmatpush1.msra.mxu0 %v639
        %661 = vmatprep.subr.mxu0 0.0
        %662 = vmatpush1.msra.mxu0 %v640
        %663 = vmatprep.subr.mxu0 0.0
        %664 = vmatpush1.msra.mxu0 %v641
        %665 = vmatprep.subr.mxu0 0.0
        %666 = vmatpush1.msra.mxu0 0.0
        %667 = vmatprep.subr.mxu0 0.0
        %668 = vmatpush1.msra.mxu0 0.0
        %669 = vmatprep.subr.mxu0 0.0
        %670 = vmatpush1.msra.mxu0 0.0
        %671 = vmatprep.subr.mxu0 0.0
        %672 = vmatpush1.msra.mxu0 0.0
        %673 = vmatprep.subr.mxu0 0.0
        %674 = vmatpush1.msra.mxu0 0.0
        %675 = vmatprep.subr.mxu0 0.0
        %676 = vmatpush1.msra.mxu0 0.0
        %677 = vmatprep.subr.mxu0 0.0
        %678 = vmatpush1.msra.mxu0 0.0
        %679 = vmatprep.subr.mxu0 0.0
        %680 = vmatpush1.msra.mxu0 0.0
        %681 = vmatprep.subr.mxu0 0.0
        %682 = vmatpush1.msra.mxu0 0.0
        %683 = vmatprep.subr.mxu0 0.0
        %684 = vmatpush1.msra.mxu0 0.0
        %685 = vmatprep.subr.mxu0 0.0
        %686 = vmatpush1.msra.mxu0 0.0
        %687 = vmatprep.subr.mxu0 0.0
        %688 = vmatpush1.msra.mxu0 0.0
        %689 = vmatprep.subr.mxu0 0.0
        %690 = vmatpush1.msra.mxu0 0.0
        %691 = vmatprep.subr.mxu0 0.0
        %692 = vmatpush1.msra.mxu0 0.0
        %693 = vmatprep.subr.mxu0 0.0
        %694 = vmatpush1.msra.mxu0 0.0
        %695 = vmatprep.subr.mxu0 0.0
        %696 = vmatpush1.msra.mxu0 0.0
        %697 = vmatprep.subr.mxu0 0.0
        %698 = vmatpush1.msra.mxu0 0.0
        %699 = vmatprep.subr.mxu0 0.0
        %700 = vmatpush1.msra.mxu0 0.0
        %701 = vmatprep.subr.mxu0 0.0
        %702 = vmatpush1.msra.mxu0 0.0
        %703 = vmatprep.subr.mxu0 0.0
        %704 = vmatpush1.msra.mxu0 0.0
        %705 = vmatprep.subr.mxu0 0.0
        %706 = vmatpush1.msra.mxu0 0.0
        %707 = vmatprep.subr.mxu0 0.0
        %708 = vmatpush1.msra.mxu0 0.0
        %709 = vmatprep.subr.mxu0 0.0
        %710 = vmatpush1.msra.mxu0 0.0
        %711 = vmatprep.subr.mxu0 0.0
        %712 = vmatpush1.msra.mxu0 0.0
        %713 = vmatprep.subr.mxu0 0.0
        %714 = vmatpush1.msra.mxu0 0.0
        %715 = vmatprep.subr.mxu0 0.0
        %716 = vmatpush1.msra.mxu0 0.0
        %717 = vmatprep.subr.mxu0 0.0
        %718 = vmatpush1.msra.mxu0 0.0
        %719 = vmatprep.subr.mxu0 0.0
        %720 = vmatpush1.msra.mxu0 0.0
        %721 = vmatprep.mubr.f32.mxu0 0.0
        %722 = vmatmul.mubr.f32.gmra.mrb[0].mxu0 %v655
        %v723 = vpop.f32.mrb[0].mxu0
        %v724 = vadd.f32 %v652, %v723
        %v725 = vpop.f32.mrb[0].mxu0
        %726 = vdwg.mxu0
        %727 = vst [vmem:[%s315] sm:$0x1] %v724
        %s728 = sand.u32 %s183, 1
        %s729 = scalar_lea.sflag [#allocation5], %s728
        %s730 = sand.u32 %s183, 1
        %s731 = scalar_lea.vmem [#allocation4], %s730
        // Predicated region
        $region87: #{tpu_custom_call.1} parent=81 // pred_check
          %p732 = pneg %p193
        $region88: #{tpu_custom_call.1} parent=81 // pred_check_branch
          %734 = sbr.rel (%p732) target = $region90
        $region89: #{tpu_custom_call.1} parent=81 // pred_region
          %s736 = ssub.s32 16, 16
          %737 = vsyncadd %s729, %s736
          %s738 = smul.addr %s23, 16
          %s739 = scalar_lea.hbm %s7, %s738
          %s741 = sshll.u32 %s731, 4
          %s742 = int_to_ptr.vmem [resolvable:$true] %s741
          %744 = dma.vmem_to_hbm [thread:$0]  %s742, 16, %s739, %s729
        $region90: #{tpu_custom_call.1} parent=81 // pred_fallthru
          _
      $region82: #{tpu_custom_call.1} parent=5 // pred_fallthru
        _
      %p745 = scmp.le.s32.totalorder 2, %s18
      // Predicated region
      $region91: #{tpu_custom_call.1} parent=5 // pred_check
        %p746 = pneg %p745
      $region92: #{tpu_custom_call.1} parent=5 // pred_check_branch
        %748 = sbr.rel (%p746) target = $region94
      $region93: #{tpu_custom_call.1} parent=5 // pred_region
        %s749 = ssub.s32 %s18, 2
        // Predicated region
        $region95: #{tpu_custom_call.1} parent=93 // pred_check
          %p750 = pneg %p199
        $region96: #{tpu_custom_call.1} parent=93 // pred_check_branch
          %752 = sbr.rel (%p750) target = $region98
        $region97: #{tpu_custom_call.1} parent=93 // pred_region
          %s753 = sand.u32 %s184, 1
          %s754 = scalar_lea.sflag [#allocation5], %s753
          %s755 = sand.u32 %s184, 1
          %s756 = scalar_lea.vmem [#allocation4], %s755
          %757 = dma.done %s754, 16
        $region98: #{tpu_custom_call.1} parent=93 // pred_fallthru
          _
      $region94: #{tpu_custom_call.1} parent=5 // pred_fallthru
        _
    $region6: #{tpu_custom_call.1} parent=1 // loop_footer
      %s22 = sadd.s32 1, %s18
    $region7: #{tpu_custom_call.1} parent=1 // loop_footer_branch
      %17 = sbr.rel target = $region3
    $region8: #{tpu_custom_call.1} parent=1 // loop_exit
      _
    %758 = vsyncpa [#allocation5], 1
    %s759 = scalar_lea.sflag [#allocation5], 1
    %760 = vsyncpa %s759, 1

</llo_original>
